<compile_context>
chip_gen: v7x
topology: tpu7x:2x2x1
jax: 0.10.0
libtpu: 0.0.40
codegen_flags: <defaults>
</compile_context>

<pallas_src>
import functools
import math

import jax
import jax.numpy as jnp
import numpy as np
from jax.experimental import pallas as pl
from jax.experimental.pallas import tpu as pltpu


def _mfhan_kernel(depth_ref, skel_ref, w_enc_ref, b_enc_ref, w_h_ref, b_h_ref,
                  w_c_ref, b_c_ref, out_ref, pooled_acc, *, batch, seq_len,
                  inv_hw):
    s = pl.program_id(0)

    @pl.when(s == 0)
    def _init():
        pooled_acc[...] = jnp.zeros_like(pooled_acc)

    # Partial global-average-pool: accumulate sums over this HW lane tile.
    # (Padded HW columns are zero, so they do not perturb the sum.)
    pooled_acc[...] += jnp.sum(depth_ref[...], axis=-1)           # (B, C)

    @pl.when(s == pl.num_programs(0) - 1)
    def _finalize():
        B, T = batch, seq_len
        D = w_h_ref.shape[0]

        # ---------------- MFEncoder ----------------
        pooled = pooled_acc[...] * inv_hw                         # (B, C)
        token = jnp.dot(pooled, w_enc_ref[...],
                        preferred_element_type=jnp.float32) + b_enc_ref[...]
        # token: (B, D) depth feature token

        # ---------------- HAN ----------------
        skel2d = skel_ref[...]                                    # (B*T, D)
        h2d = jnp.tanh(jnp.dot(skel2d, w_h_ref[...],
                               preferred_element_type=jnp.float32)
                       + b_h_ref[...])                            # (B*T, D)

        # Block-diagonal wide scores: row b only attends to its own T rows.
        scale = 1.0 / math.sqrt(D)
        scores = jnp.einsum('bd,nd->bn', token, h2d,
                            preferred_element_type=jnp.float32) * scale
        col = jax.lax.broadcasted_iota(jnp.int32, (B, B * T), 1)
        row = jax.lax.broadcasted_iota(jnp.int32, (B, B * T), 0)
        valid = (col >= row * T) & (col < row * T + T)
        scores = jnp.where(valid, scores, jnp.float32(-1e30))

        m = jnp.max(scores, axis=-1, keepdims=True)
        e = jnp.exp(scores - m)
        denom = jnp.sum(e, axis=-1, keepdims=True)
        alpha = e * pl.reciprocal(denom, approx=True)             # (B, B*T)

        # Attention-weighted sum over time as one MXU matmul.
        context = jnp.dot(alpha, skel2d,
                          preferred_element_type=jnp.float32)     # (B, D)

        logits = jnp.dot(context, w_c_ref[...],
                         preferred_element_type=jnp.float32) + b_c_ref[...]
        out_ref[...] = logits.astype(out_ref.dtype)               # (B, NC_pad)


def mfhan_forward(skeleton_features, depth_features, params, *, hw_tile=None):
    B, T, D = skeleton_features.shape
    Bd, C, H, W = depth_features.shape
    assert B == Bd
    HW = H * W

    # Flatten NCHW -> (B, C, HW); pad HW (lane dim) to a multiple of 128.
    hw_pad = ((HW + 127) // 128) * 128
    depth_flat = depth_features.reshape(B, C, HW).astype(jnp.float32)
    if hw_pad != HW:
        depth_flat = jnp.pad(depth_flat, ((0, 0), (0, 0), (0, hw_pad - HW)))

    # Depth tile size: <= ~8 MiB so double-buffering fits scoped VMEM on all
    # of v5e (16 MiB default) / v6e (32 MiB) / v7x (64 MiB physical).
    if hw_tile is None:
        max_lanes = max(128, (8 * 1024 * 1024) // (4 * B * C))
        hw_tile = min(hw_pad, (max_lanes // 128) * 128)
    hw_tile = max(128, (hw_tile // 128) * 128)
    while hw_pad % hw_tile != 0:
        hw_tile -= 128
    n_tiles = hw_pad // hw_tile

    # Pre-flatten skeleton in the wrapper (free layout plumbing in XLA).
    skel2d = skeleton_features.reshape(B * T, D).astype(jnp.float32)

    # Lane-dense classifier output: pad num_classes up to a multiple of 128.
    num_classes = params["b_c"].shape[-1]
    nc_pad = ((num_classes + 127) // 128) * 128
    w_c, b_c = params["W_c"], params["b_c"]
    if nc_pad != num_classes:
        w_c = jnp.pad(w_c, ((0, 0), (0, nc_pad - num_classes)))
        b_c = jnp.pad(b_c, ((0, 0), (0, nc_pad - num_classes)))

    kernel = functools.partial(_mfhan_kernel, batch=B, seq_len=T,
                               inv_hw=1.0 / HW)

    tile_bytes = 4 * B * C * hw_tile
    small_bytes = 4 * (B * T * D + C * D + D + D * D + D + D * nc_pad + nc_pad
                       + B * nc_pad + B * C)
    vmem_limit = min(48 << 20,
                     int(2.5 * (2 * tile_bytes + 2 * small_bytes)) + (4 << 20))

    grid_spec = pltpu.PrefetchScalarGridSpec(
        num_scalar_prefetch=0,
        grid=(n_tiles,),
        in_specs=[
            pl.BlockSpec((B, C, hw_tile), lambda s: (0, 0, s)),   # depth tiles
            pl.BlockSpec((B * T, D), lambda s: (0, 0)),           # skeleton
            pl.BlockSpec((C, D), lambda s: (0, 0)),               # W_enc
            pl.BlockSpec((1, D), lambda s: (0, 0)),               # b_enc
            pl.BlockSpec((D, D), lambda s: (0, 0)),               # W_h
            pl.BlockSpec((1, D), lambda s: (0, 0)),               # b_h
            pl.BlockSpec((D, nc_pad), lambda s: (0, 0)),          # W_c (padded)
            pl.BlockSpec((1, nc_pad), lambda s: (0, 0)),          # b_c (padded)
        ],
        out_specs=pl.BlockSpec((B, nc_pad), lambda s: (0, 0)),
        scratch_shapes=[pltpu.VMEM((B, C), jnp.float32)],
    )

    out_padded = pl.pallas_call(
        kernel,
        out_shape=jax.ShapeDtypeStruct((B, nc_pad), jnp.float32),
        grid_spec=grid_spec,
        compiler_params=pltpu.CompilerParams(
            dimension_semantics=("arbitrary",),
            vmem_limit_bytes=vmem_limit),
    )(depth_flat, skel2d,
      params["W_enc"], params["b_enc"],
      params["W_h"], params["b_h"],
      w_c, b_c)

    return out_padded[:, :num_classes]


def mfhan_reference(skeleton_features, depth_features, params):
    """Pure-JAX reference for numerical validation."""
    B, T, D = skeleton_features.shape
    pooled = jnp.mean(depth_features.reshape(B, depth_features.shape[1], -1), -1)
    token = pooled @ params["W_enc"] + params["b_enc"]
    h = jnp.tanh(skeleton_features @ params["W_h"] + params["b_h"])
    scores = jnp.sum(h * token[:, None, :], -1) / math.sqrt(D)
    alpha = jax.nn.softmax(scores, axis=-1)
    context = jnp.sum(alpha[:, :, None] * skeleton_features, axis=1)
    return context @ params["W_c"] + params["b_c"]


def init_params(key, C, D, num_classes):
    k1, k2, k3 = jax.random.split(key, 3)
    return {
        "W_enc": jax.random.normal(k1, (C, D), jnp.float32) * (1.0 / math.sqrt(C)),
        "b_enc": jnp.zeros((1, D), jnp.float32),
        "W_h":   jax.random.normal(k2, (D, D), jnp.float32) * (1.0 / math.sqrt(D)),
        "b_h":   jnp.zeros((1, D), jnp.float32),
        "W_c":   jax.random.normal(k3, (D, num_classes), jnp.float32) * (1.0 / math.sqrt(D)),
        "b_c":   jnp.zeros((1, num_classes), jnp.float32),
    }


if __name__ == "__main__":
    B, C, H, W = 2, 4, 16, 16       # depth features (NCHW)
    T, D = 8, 32                    # skeleton sequence length, feature dim
    num_classes = 10

    key = jax.random.PRNGKey(0)
    k_skel, k_depth, k_param = jax.random.split(key, 3)

    skeleton = jax.random.normal(k_skel, (B, T, D), jnp.float32)
    depth = jax.random.normal(k_depth, (B, C, H, W), jnp.float32)
    params = init_params(k_param, C, D, num_classes)

    # hw_tile=128 forces a 2-step grid so the pl.when accumulate path is
    # exercised even at these toy shapes.
    out = mfhan_forward(skeleton, depth, params, hw_tile=128)
    out = jax.block_until_ready(out)

    ref = mfhan_reference(skeleton, depth, params)
    # approx reciprocal in the softmax denominator -> slightly relaxed tol.
    np.testing.assert_allclose(np.asarray(out), np.asarray(ref),
                               rtol=2e-3, atol=2e-3)
    print("KERNEL_OK")
</pallas_src>

<mosaic_0001>
module attributes {stable_mosaic.version = 11 : i64} {
  func.func @_mfhan_kernel(%arg0: i32, %arg1: memref<2x4x128xf32, #tpu.memory_space<vmem>>, %arg2: memref<16x32xf32, #tpu.memory_space<vmem>>, %arg3: memref<4x32xf32, #tpu.memory_space<vmem>>, %arg4: memref<1x32xf32, #tpu.memory_space<vmem>>, %arg5: memref<32x32xf32, #tpu.memory_space<vmem>>, %arg6: memref<1x32xf32, #tpu.memory_space<vmem>>, %arg7: memref<32x128xf32, #tpu.memory_space<vmem>>, %arg8: memref<1x128xf32, #tpu.memory_space<vmem>>, %arg9: memref<2x128xf32, #tpu.memory_space<vmem>>, %arg10: memref<2x4xf32, #tpu.memory_space<vmem>>) attributes {dimension_semantics = [#tpu.dimension_semantics<arbitrary>], iteration_bounds = array<i64: 2>, scalar_prefetch = 0 : i64, scratch_operands = 1 : i64, tpu.core_type = #tpu.core_type<tc>, window_params = [{transform_indices = @transform_0, window_bounds = array<i64: 2, 4, 128>}, {pipeline_mode = #tpu.pipeline_mode<synchronous>, transform_indices = @transform_1, window_bounds = array<i64: 16, 32>}, {pipeline_mode = #tpu.pipeline_mode<synchronous>, transform_indices = @transform_2, window_bounds = array<i64: 4, 32>}, {pipeline_mode = #tpu.pipeline_mode<synchronous>, transform_indices = @transform_3, window_bounds = array<i64: 1, 32>}, {pipeline_mode = #tpu.pipeline_mode<synchronous>, transform_indices = @transform_4, window_bounds = array<i64: 32, 32>}, {pipeline_mode = #tpu.pipeline_mode<synchronous>, transform_indices = @transform_5, window_bounds = array<i64: 1, 32>}, {pipeline_mode = #tpu.pipeline_mode<synchronous>, transform_indices = @transform_6, window_bounds = array<i64: 32, 128>}, {pipeline_mode = #tpu.pipeline_mode<synchronous>, transform_indices = @transform_7, window_bounds = array<i64: 1, 128>}, {pipeline_mode = #tpu.pipeline_mode<synchronous>, transform_indices = @transform_8, window_bounds = array<i64: 2, 128>}]} {
    %c0_i32 = arith.constant 0 : i32
    %0 = arith.cmpi eq, %arg0, %c0_i32 : i32
    %1 = arith.extui %0 : i1 to i32
    %c0_i32_0 = arith.constant 0 : i32
    %2 = arith.cmpi ne, %1, %c0_i32_0 : i32
    scf.if %2 {
      %cst_8 = arith.constant 0.000000e+00 : f32
      %11 = vector.broadcast %cst_8 : f32 to vector<2x4xf32>
      %c0_9 = arith.constant 0 : index
      %c0_10 = arith.constant 0 : index
      %12 = vector.load %arg10[%c0_9, %c0_10] : memref<2x4xf32, #tpu.memory_space<vmem>>, vector<2x4xf32>
      tpu.vector_store %arg10[%c0_9, %c0_10], %11 {strides = array<i32>} : memref<2x4xf32, #tpu.memory_space<vmem>>, vector<2x4xf32>,
    } else {
    }
    %c0 = arith.constant 0 : index
    %c0_1 = arith.constant 0 : index
    %3 = vector.load %arg10[%c0, %c0_1] : memref<2x4xf32, #tpu.memory_space<vmem>>, vector<2x4xf32>
    %c0_2 = arith.constant 0 : index
    %c0_3 = arith.constant 0 : index
    %c0_4 = arith.constant 0 : index
    %4 = vector.load %arg1[%c0_2, %c0_3, %c0_4] : memref<2x4x128xf32, #tpu.memory_space<vmem>>, vector<2x4x128xf32>
    %cst = arith.constant dense<0.000000e+00> : vector<2x4xf32>
    %5 = vector.multi_reduction <add>, %4, %cst [2] : vector<2x4x128xf32> to vector<2x4xf32>
    %6 = arith.addf %3, %5 : vector<2x4xf32>
    %c0_5 = arith.constant 0 : index
    %c0_6 = arith.constant 0 : index
    %7 = vector.load %arg10[%c0_5, %c0_6] : memref<2x4xf32, #tpu.memory_space<vmem>>, vector<2x4xf32>
    tpu.vector_store %arg10[%c0_5, %c0_6], %6 {strides = array<i32>} : memref<2x4xf32, #tpu.memory_space<vmem>>, vector<2x4xf32>,
    %c1_i32 = arith.constant 1 : i32
    %8 = arith.cmpi eq, %arg0, %c1_i32 : i32
    %9 = arith.extui %8 : i1 to i32
    %c0_i32_7 = arith.constant 0 : i32
    %10 = arith.cmpi ne, %9, %c0_i32_7 : i32
    scf.if %10 {
      %c0_8 = arith.constant 0 : index
      %c0_9 = arith.constant 0 : index
      %11 = vector.load %arg10[%c0_8, %c0_9] : memref<2x4xf32, #tpu.memory_space<vmem>>, vector<2x4xf32>
      %cst_10 = arith.constant 3.906250e-03 : f32
      %12 = vector.broadcast %cst_10 : f32 to vector<2x4xf32>
      %13 = arith.mulf %11, %12 : vector<2x4xf32>
      %c0_11 = arith.constant 0 : index
      %c0_12 = arith.constant 0 : index
      %14 = vector.load %arg3[%c0_11, %c0_12] : memref<4x32xf32, #tpu.memory_space<vmem>>, vector<4x32xf32>
      %cst_13 = arith.constant dense<0.000000e+00> : vector<2x32xf32>
      %15 = tpu.matmul %13, %14, %cst_13 {dimension_numbers = #tpu.dot_dimension_numbers<[1], [0], [0], [1], [0, 0, 1, 1], [], []>} : vector<2x4xf32>, vector<4x32xf32>, vector<2x32xf32> -> vector<2x32xf32>
      %c0_14 = arith.constant 0 : index
      %c0_15 = arith.constant 0 : index
      %16 = vector.load %arg4[%c0_14, %c0_15] : memref<1x32xf32, #tpu.memory_space<vmem>>, vector<1x32xf32>
      %17 = vector.broadcast %16 : vector<1x32xf32> to vector<2x32xf32>
      %18 = arith.addf %15, %17 : vector<2x32xf32>
      %c0_16 = arith.constant 0 : index
      %c0_17 = arith.constant 0 : index
      %19 = vector.load %arg2[%c0_16, %c0_17] : memref<16x32xf32, #tpu.memory_space<vmem>>, vector<16x32xf32>
      %c0_18 = arith.constant 0 : index
      %c0_19 = arith.constant 0 : index
      %20 = vector.load %arg5[%c0_18, %c0_19] : memref<32x32xf32, #tpu.memory_space<vmem>>, vector<32x32xf32>
      %cst_20 = arith.constant dense<0.000000e+00> : vector<16x32xf32>
      %21 = tpu.matmul %19, %20, %cst_20 {dimension_numbers = #tpu.dot_dimension_numbers<[1], [0], [0], [1], [0, 0, 1, 1], [], []>} : vector<16x32xf32>, vector<32x32xf32>, vector<16x32xf32> -> vector<16x32xf32>
      %c0_21 = arith.constant 0 : index
      %c0_22 = arith.constant 0 : index
      %22 = vector.load %arg6[%c0_21, %c0_22] : memref<1x32xf32, #tpu.memory_space<vmem>>, vector<1x32xf32>
      %23 = vector.broadcast %22 : vector<1x32xf32> to vector<16x32xf32>
      %24 = arith.addf %21, %23 : vector<16x32xf32>
      %25 = math.tanh %24 : vector<16x32xf32>
      "tpu.trace_start"() <{level = 10 : i32, message = "bd,nd->bn"}> : () -> ()
      %cst_23 = arith.constant dense<0.000000e+00> : vector<2x16xf32>
      %26 = tpu.matmul %18, %25, %cst_23 {dimension_numbers = #tpu.dot_dimension_numbers<[1], [1], [0], [0], [0, 0, 1, 0], [], []>} : vector<2x32xf32>, vector<16x32xf32>, vector<2x16xf32> -> vector<2x16xf32>
      "tpu.trace_stop"() : () -> ()
      %cst_24 = arith.constant 0.176776692 : f32
      %27 = vector.broadcast %cst_24 : f32 to vector<2x16xf32>
      %28 = arith.mulf %26, %27 : vector<2x16xf32>
      %29 = tpu.iota {dimensions = array<i32: 1>} : vector<2x16xi32>
      %30 = tpu.iota {dimensions = array<i32: 0>} : vector<2x16xi32>
      %c8_i32 = arith.constant 8 : i32
      %31 = vector.broadcast %c8_i32 : i32 to vector<2x16xi32>
      %32 = arith.muli %30, %31 : vector<2x16xi32>
      %33 = arith.cmpi sge, %29, %32 : vector<2x16xi32>
      %c8_i32_25 = arith.constant 8 : i32
      %34 = vector.broadcast %c8_i32_25 : i32 to vector<2x16xi32>
      %35 = arith.muli %30, %34 : vector<2x16xi32>
      %c8_i32_26 = arith.constant 8 : i32
      %36 = vector.broadcast %c8_i32_26 : i32 to vector<2x16xi32>
      %37 = arith.addi %35, %36 : vector<2x16xi32>
      %38 = arith.cmpi slt, %29, %37 : vector<2x16xi32>
      %39 = arith.andi %33, %38 : vector<2x16xi1>
      %cst_27 = arith.constant -1.000000e+30 : f32
      %40 = vector.broadcast %cst_27 : f32 to vector<2x16xf32>
      %41 = arith.select %39, %28, %40 : vector<2x16xi1>, vector<2x16xf32>
      %cst_28 = arith.constant dense<0xFF800000> : vector<2xf32>
      %42 = vector.multi_reduction <maximumf>, %41, %cst_28 [1] : vector<2x16xf32> to vector<2xf32>
      %43 = vector.shape_cast %42 : vector<2xf32> to vector<2x1xf32>
      %44 = vector.broadcast %43 : vector<2x1xf32> to vector<2x16xf32>
      %45 = arith.subf %41, %44 : vector<2x16xf32>
      %46 = math.exp %45 : vector<2x16xf32>
      %cst_29 = arith.constant dense<0.000000e+00> : vector<2xf32>
      %47 = vector.multi_reduction <add>, %46, %cst_29 [1] : vector<2x16xf32> to vector<2xf32>
      %48 = vector.shape_cast %47 : vector<2xf32> to vector<2x1xf32>
      %49 = tpu.reciprocal %48 {approx = true} : vector<2x1xf32> -> vector<2x1xf32>
      %50 = vector.broadcast %49 : vector<2x1xf32> to vector<2x16xf32>
      %51 = arith.mulf %46, %50 : vector<2x16xf32>
      %cst_30 = arith.constant dense<0.000000e+00> : vector<2x32xf32>
      %52 = tpu.matmul %51, %19, %cst_30 {dimension_numbers = #tpu.dot_dimension_numbers<[1], [0], [0], [1], [0, 0, 1, 1], [], []>} : vector<2x16xf32>, vector<16x32xf32>, vector<2x32xf32> -> vector<2x32xf32>
      %c0_31 = arith.constant 0 : index
      %c0_32 = arith.constant 0 : index
      %53 = vector.load %arg7[%c0_31, %c0_32] : memref<32x128xf32, #tpu.memory_space<vmem>>, vector<32x128xf32>
      %cst_33 = arith.constant dense<0.000000e+00> : vector<2x128xf32>
      %54 = tpu.matmul %52, %53, %cst_33 {dimension_numbers = #tpu.dot_dimension_numbers<[1], [0], [0], [1], [0, 0, 1, 1], [], []>} : vector<2x32xf32>, vector<32x128xf32>, vector<2x128xf32> -> vector<2x128xf32>
      %c0_34 = arith.constant 0 : index
      %c0_35 = arith.constant 0 : index
      %55 = vector.load %arg8[%c0_34, %c0_35] : memref<1x128xf32, #tpu.memory_space<vmem>>, vector<1x128xf32>
      %56 = vector.broadcast %55 : vector<1x128xf32> to vector<2x128xf32>
      %57 = arith.addf %54, %56 : vector<2x128xf32>
      %c0_36 = arith.constant 0 : index
      %c0_37 = arith.constant 0 : index
      %58 = vector.load %arg9[%c0_36, %c0_37] : memref<2x128xf32, #tpu.memory_space<vmem>>, vector<2x128xf32>
      tpu.vector_store %arg9[%c0_36, %c0_37], %57 {strides = array<i32>} : memref<2x128xf32, #tpu.memory_space<vmem>>, vector<2x128xf32>,
    } else {
    }
    return
  }
  func.func @transform_0(%arg0: i32) -> (i32, i32, i32) {
    %c0_i32 = arith.constant 0 : i32
    %c0_i32_0 = arith.constant 0 : i32
    %c0_i32_1 = arith.constant 0 : i32
    return %c0_i32, %c0_i32_0, %arg0 : i32, i32, i32
  }
  func.func @transform_1(%arg0: i32) -> (i32, i32) {
    %c0_i32 = arith.constant 0 : i32
    %c0_i32_0 = arith.constant 0 : i32
    %c0_i32_1 = arith.constant 0 : i32
    return %c0_i32, %c0_i32_0 : i32, i32
  }
  func.func @transform_2(%arg0: i32) -> (i32, i32) {
    %c0_i32 = arith.constant 0 : i32
    %c0_i32_0 = arith.constant 0 : i32
    %c0_i32_1 = arith.constant 0 : i32
    return %c0_i32, %c0_i32_0 : i32, i32
  }
  func.func @transform_3(%arg0: i32) -> (i32, i32) {
    %c0_i32 = arith.constant 0 : i32
    %c0_i32_0 = arith.constant 0 : i32
    %c0_i32_1 = arith.constant 0 : i32
    return %c0_i32, %c0_i32_0 : i32, i32
  }
  func.func @transform_4(%arg0: i32) -> (i32, i32) {
    %c0_i32 = arith.constant 0 : i32
    %c0_i32_0 = arith.constant 0 : i32
    %c0_i32_1 = arith.constant 0 : i32
    return %c0_i32, %c0_i32_0 : i32, i32
  }
  func.func @transform_5(%arg0: i32) -> (i32, i32) {
    %c0_i32 = arith.constant 0 : i32
    %c0_i32_0 = arith.constant 0 : i32
    %c0_i32_1 = arith.constant 0 : i32
    return %c0_i32, %c0_i32_0 : i32, i32
  }
  func.func @transform_6(%arg0: i32) -> (i32, i32) {
    %c0_i32 = arith.constant 0 : i32
    %c0_i32_0 = arith.constant 0 : i32
    %c0_i32_1 = arith.constant 0 : i32
    return %c0_i32, %c0_i32_0 : i32, i32
  }
  func.func @transform_7(%arg0: i32) -> (i32, i32) {
    %c0_i32 = arith.constant 0 : i32
    %c0_i32_0 = arith.constant 0 : i32
    %c0_i32_1 = arith.constant 0 : i32
    return %c0_i32, %c0_i32_0 : i32, i32
  }
  func.func @transform_8(%arg0: i32) -> (i32, i32) {
    %c0_i32 = arith.constant 0 : i32
    %c0_i32_0 = arith.constant 0 : i32
    %c0_i32_1 = arith.constant 0 : i32
    return %c0_i32, %c0_i32_0 : i32, i32
  }
}

</mosaic_0001>

<llo_original>
// kernel: tpu_custom_call.1
$region0: #{tpu_custom_call.1}
  #allocation0 [shape = 'u32[]', space=smem, size = 0x4, offset = 0x4, fixed_abs, tag = 'smem constant byte address 0x4 - core index']
  #allocation1 [shape = 'u32[144,128]{1,0:T(1,128)}', space=vmem, size = 0x12000, scoped, tag = 'internal scratch']
  #allocation2 [shape = 'f32[2,4]{1,0:T(2,128)}', space=vmem, size = 0x400, scoped, tag = 'scratch operand']
  %s0 = inlined_call_operand.hbm [shape: f32[2,4,256], index: 0, kind: input, shape index: {}]
  %s1 = inlined_call_operand.hbm [shape: f32[16,32], index: 1, kind: input, shape index: {}]
  %s2 = inlined_call_operand.vmem [shape: f32[4,32], index: 2, kind: input, shape index: {}]
  %s3 = inlined_call_operand.vmem [shape: f32[1,32], index: 3, kind: input, shape index: {}]
  %s4 = inlined_call_operand.hbm [shape: f32[32,32], index: 4, kind: input, shape index: {}]
  %s5 = inlined_call_operand.vmem [shape: f32[1,32], index: 5, kind: input, shape index: {}]
  %s6 = inlined_call_operand.hbm [shape: f32[32,128], index: 6, kind: input, shape index: {}]
  %s7 = inlined_call_operand.vmem [shape: f32[1,128], index: 7, kind: input, shape index: {}]
  %s8 = inlined_call_operand.hbm [shape: f32[2,128], index: 8, kind: output, shape index: {}]
  %s9 = sld [smem:[#allocation0]]
  $region89: #{tpu_custom_call.1} parent=0
    _
  %s11 = ssub.s32 1, %s9
  %s12 = scalar_select 0, %s11, %s9
  $region1: #{tpu_custom_call.1} parent=0
    #allocation3 [shape = 'u8[8192]{0}', space=vmem, size = 0x2000, scoped, tag = 'input window, operand 0']
    #allocation4 [shape = 's32[2]{0}', space=sflag, size = 0x8, scoped, tag = 'scoped memory for tpu_custom_call.1']
    #allocation5 [shape = 's32[2]{0}', space=sflag, size = 0x8, scoped, tag = 'scoped memory for tpu_custom_call.1']
    #allocation6 [shape = 'u8[8192]{0}', space=vmem, size = 0x2000, scoped, tag = 'input window, operand 1, single buffered']
    #allocation7 [shape = 's32[1]{0}', space=sflag, size = 0x4, scoped, tag = 'scoped memory for tpu_custom_call.1']
    #allocation8 [shape = 'u8[16384]{0}', space=vmem, size = 0x4000, scoped, tag = 'input window, operand 4, single buffered']
    #allocation9 [shape = 'u8[16384]{0}', space=vmem, size = 0x4000, scoped, tag = 'input window, operand 6, single buffered']
    #allocation10 [shape = 's32[1]{0}', space=sflag, size = 0x4, scoped, tag = 'scoped memory for tpu_custom_call.1']
    #allocation11 [shape = 'u8[1024]{0}', space=vmem, size = 0x400, scoped, tag = 'output window, operand 0, single buffered']
    %13 = vsyncpa [#allocation4], 0
    %s14 = scalar_lea.sflag [#allocation4], 1
    %15 = vsyncpa %s14, 0
    %16 = vsyncpa [#allocation7], 0
    %17 = vsyncpa [#allocation10], 0
    %18 = vsyncpa [#allocation5], 0
    loop: start=0, step=1, limit=4
    $region2: #{tpu_custom_call.1} parent=1 // loop_pre_header
      _
    $region3: #{tpu_custom_call.1} parent=1 // loop_header
      %s20 = sphi 0, %s24
      %p21 = scmp.ge.s32.totalorder %s20, 4
      %s30 = sphi 0, %s32
      %s33 = sphi 0, %s30
      %s34 = sphi 0, %s33
      %s50 = sphi 0, %s34
      %s54 = sphi 0, %s54
      %s56 = sphi 0, %s54
      %s57 = sphi 0, %s56
      %s71 = sphi 0, %s57
      %s75 = sphi 0, %s75
      %s77 = sphi 0, %s75
      %s78 = sphi 0, %s77
      %s92 = sphi 0, %s78
      %s96 = sphi 0, %s96
      %s98 = sphi 0, %s96
      %s99 = sphi 0, %s98
      %s113 = sphi 0, %s99
      %s117 = sphi 0, %s117
      %s119 = sphi 0, %s117
      %s120 = sphi 0, %s119
      %s134 = sphi 0, %s120
      %s138 = sphi 0, %s138
      %s140 = sphi 0, %s138
      %s141 = sphi 0, %s140
      %s155 = sphi 0, %s141
      %s159 = sphi 0, %s159
      %s161 = sphi 0, %s159
      %s162 = sphi 0, %s161
      %s176 = sphi 0, %s162
      %s180 = sphi 0, %s180
      %s182 = sphi 0, %s180
      %s183 = sphi 0, %s182
      %s197 = sphi 0, %s183
      %s201 = sphi 0, %s201
      %s203 = sphi 0, %s201
      %s204 = sphi 0, %s203
      %s218 = sphi 0, %s204
    $region4: #{tpu_custom_call.1} parent=1 // loop_header_branch
      %23 = sbr.rel (%p21) target = $region8
    $region5: #{tpu_custom_call.1} parent=1 // loop_body
      %s25 = ssub.s32 %s20, 1
      %s26 = ssub.s32 %s20, 2
      %s27 = sadd.s32 %s20, 1
      %s28 = ssub.s32 %s20, %s27
      %p29 = scmp.eq.s32.totalorder %s28, 0
      %s31 = sadd.s32 %s30, 1
      %s32 = scalar_select %p29, %s30, %s31
      %p35 = pneg %p29
      %p36 = scmp.eq.s32.totalorder %s20, 1
      %p37 = por %p35, %p36
      %p38 = scmp.ne.s32.totalorder %s30, %s33
      %p39 = scmp.eq.s32.totalorder %s20, 0
      %p40 = por %p38, %p39
      %p41 = scmp.ne.s32.totalorder %s30, %s33
      %p42 = scmp.eq.s32.totalorder %s25, 1
      %p43 = por %p41, %p42
      %p44 = scmp.ne.s32.totalorder %s33, %s34
      %p45 = scmp.eq.s32.totalorder %s25, 0
      %p46 = por %p44, %p45
      %p47 = scmp.ne.s32.totalorder %s33, %s34
      %p48 = scmp.eq.s32.totalorder %s26, 1
      %p49 = por %p47, %p48
      %p51 = scmp.ne.s32.totalorder %s34, %s50
      %p52 = scmp.eq.s32.totalorder %s26, 0
      %p53 = por %p51, %p52
      %s55 = sadd.s32 %s54, 1
      %p58 = scmp.eq.s32.totalorder %s20, 1
      %p59 = scmp.ne.s32.totalorder %s54, %s56
      %p60 = scmp.eq.s32.totalorder %s20, 0
      %p61 = por %p59, %p60
      %p62 = scmp.ne.s32.totalorder %s54, %s56
      %p63 = scmp.eq.s32.totalorder %s25, 1
      %p64 = por %p62, %p63
      %p65 = scmp.ne.s32.totalorder %s56, %s57
      %p66 = scmp.eq.s32.totalorder %s25, 0
      %p67 = por %p65, %p66
      %p68 = scmp.ne.s32.totalorder %s56, %s57
      %p69 = scmp.eq.s32.totalorder %s26, 1
      %p70 = por %p68, %p69
      %p72 = scmp.ne.s32.totalorder %s57, %s71
      %p73 = scmp.eq.s32.totalorder %s26, 0
      %p74 = por %p72, %p73
      %s76 = sadd.s32 %s75, 1
      %p79 = scmp.eq.s32.totalorder %s20, 1
      %p80 = scmp.ne.s32.totalorder %s75, %s77
      %p81 = scmp.eq.s32.totalorder %s20, 0
      %p82 = por %p80, %p81
      %p83 = scmp.ne.s32.totalorder %s75, %s77
      %p84 = scmp.eq.s32.totalorder %s25, 1
      %p85 = por %p83, %p84
      %p86 = scmp.ne.s32.totalorder %s77, %s78
      %p87 = scmp.eq.s32.totalorder %s25, 0
      %p88 = por %p86, %p87
      %p89 = scmp.ne.s32.totalorder %s77, %s78
      %p90 = scmp.eq.s32.totalorder %s26, 1
      %p91 = por %p89, %p90
      %p93 = scmp.ne.s32.totalorder %s78, %s92
      %p94 = scmp.eq.s32.totalorder %s26, 0
      %p95 = por %p93, %p94
      %s97 = sadd.s32 %s96, 1
      %p100 = scmp.eq.s32.totalorder %s20, 1
      %p101 = scmp.ne.s32.totalorder %s96, %s98
      %p102 = scmp.eq.s32.totalorder %s20, 0
      %p103 = por %p101, %p102
      %p104 = scmp.ne.s32.totalorder %s96, %s98
      %p105 = scmp.eq.s32.totalorder %s25, 1
      %p106 = por %p104, %p105
      %p107 = scmp.ne.s32.totalorder %s98, %s99
      %p108 = scmp.eq.s32.totalorder %s25, 0
      %p109 = por %p107, %p108
      %p110 = scmp.ne.s32.totalorder %s98, %s99
      %p111 = scmp.eq.s32.totalorder %s26, 1
      %p112 = por %p110, %p111
      %p114 = scmp.ne.s32.totalorder %s99, %s113
      %p115 = scmp.eq.s32.totalorder %s26, 0
      %p116 = por %p114, %p115
      %s118 = sadd.s32 %s117, 1
      %p121 = scmp.eq.s32.totalorder %s20, 1
      %p122 = scmp.ne.s32.totalorder %s117, %s119
      %p123 = scmp.eq.s32.totalorder %s20, 0
      %p124 = por %p122, %p123
      %p125 = scmp.ne.s32.totalorder %s117, %s119
      %p126 = scmp.eq.s32.totalorder %s25, 1
      %p127 = por %p125, %p126
      %p128 = scmp.ne.s32.totalorder %s119, %s120
      %p129 = scmp.eq.s32.totalorder %s25, 0
      %p130 = por %p128, %p129
      %p131 = scmp.ne.s32.totalorder %s119, %s120
      %p132 = scmp.eq.s32.totalorder %s26, 1
      %p133 = por %p131, %p132
      %p135 = scmp.ne.s32.totalorder %s120, %s134
      %p136 = scmp.eq.s32.totalorder %s26, 0
      %p137 = por %p135, %p136
      %s139 = sadd.s32 %s138, 1
      %p142 = scmp.eq.s32.totalorder %s20, 1
      %p143 = scmp.ne.s32.totalorder %s138, %s140
      %p144 = scmp.eq.s32.totalorder %s20, 0
      %p145 = por %p143, %p144
      %p146 = scmp.ne.s32.totalorder %s138, %s140
      %p147 = scmp.eq.s32.totalorder %s25, 1
      %p148 = por %p146, %p147
      %p149 = scmp.ne.s32.totalorder %s140, %s141
      %p150 = scmp.eq.s32.totalorder %s25, 0
      %p151 = por %p149, %p150
      %p152 = scmp.ne.s32.totalorder %s140, %s141
      %p153 = scmp.eq.s32.totalorder %s26, 1
      %p154 = por %p152, %p153
      %p156 = scmp.ne.s32.totalorder %s141, %s155
      %p157 = scmp.eq.s32.totalorder %s26, 0
      %p158 = por %p156, %p157
      %s160 = sadd.s32 %s159, 1
      %p163 = scmp.eq.s32.totalorder %s20, 1
      %p164 = scmp.ne.s32.totalorder %s159, %s161
      %p165 = scmp.eq.s32.totalorder %s20, 0
      %p166 = por %p164, %p165
      %p167 = scmp.ne.s32.totalorder %s159, %s161
      %p168 = scmp.eq.s32.totalorder %s25, 1
      %p169 = por %p167, %p168
      %p170 = scmp.ne.s32.totalorder %s161, %s162
      %p171 = scmp.eq.s32.totalorder %s25, 0
      %p172 = por %p170, %p171
      %p173 = scmp.ne.s32.totalorder %s161, %s162
      %p174 = scmp.eq.s32.totalorder %s26, 1
      %p175 = por %p173, %p174
      %p177 = scmp.ne.s32.totalorder %s162, %s176
      %p178 = scmp.eq.s32.totalorder %s26, 0
      %p179 = por %p177, %p178
      %s181 = sadd.s32 %s180, 1
      %p184 = scmp.eq.s32.totalorder %s20, 1
      %p185 = scmp.ne.s32.totalorder %s180, %s182
      %p186 = scmp.eq.s32.totalorder %s20, 0
      %p187 = por %p185, %p186
      %p188 = scmp.ne.s32.totalorder %s180, %s182
      %p189 = scmp.eq.s32.totalorder %s25, 1
      %p190 = por %p188, %p189
      %p191 = scmp.ne.s32.totalorder %s182, %s183
      %p192 = scmp.eq.s32.totalorder %s25, 0
      %p193 = por %p191, %p192
      %p194 = scmp.ne.s32.totalorder %s182, %s183
      %p195 = scmp.eq.s32.totalorder %s26, 1
      %p196 = por %p194, %p195
      %p198 = scmp.ne.s32.totalorder %s183, %s197
      %p199 = scmp.eq.s32.totalorder %s26, 0
      %p200 = por %p198, %p199
      %s202 = sadd.s32 %s201, 1
      %p205 = scmp.eq.s32.totalorder %s20, 1
      %p206 = scmp.ne.s32.totalorder %s201, %s203
      %p207 = scmp.eq.s32.totalorder %s20, 0
      %p208 = por %p206, %p207
      %p209 = scmp.ne.s32.totalorder %s201, %s203
      %p210 = scmp.eq.s32.totalorder %s25, 1
      %p211 = por %p209, %p210
      %p212 = scmp.ne.s32.totalorder %s203, %s204
      %p213 = scmp.eq.s32.totalorder %s25, 0
      %p214 = por %p212, %p213
      %p215 = scmp.ne.s32.totalorder %s203, %s204
      %p216 = scmp.eq.s32.totalorder %s26, 1
      %p217 = por %p215, %p216
      %p219 = scmp.ne.s32.totalorder %s204, %s218
      %p220 = scmp.eq.s32.totalorder %s26, 0
      %p221 = por %p219, %p220
      %p222 = scmp.le.s32.totalorder 1, %s20
      %p223 = scmp.lt.s32.totalorder %s20, 3
      %p224 = pnand %p222, %p223
      %p225 = pneg %p224
      // Predicated region
      $region9: #{tpu_custom_call.1} parent=5 // pred_check
        _
      $region10: #{tpu_custom_call.1} parent=5 // pred_check_branch
        %227 = sbr.rel (%p224) target = $region12
      $region11: #{tpu_custom_call.1} parent=5 // pred_region
        %s228 = ssub.s32 %s20, 1
        // Predicated region
        $region13: #{tpu_custom_call.1} parent=11 // pred_check
          %p229 = pneg %p67
        $region14: #{tpu_custom_call.1} parent=11 // pred_check_branch
          %231 = sbr.rel (%p229) target = $region16
        $region15: #{tpu_custom_call.1} parent=11 // pred_region
          %s233 = ssub.s32 256, 256
          %234 = vsyncadd [#allocation7], %s233
          %s235 = sshll.u32 [#allocation6], 4
          %s236 = int_to_ptr.vmem [resolvable:$true] %s235
          %241 = dma.hbm_to_vmem [thread:$0]  %s1, 256, %s236, [#allocation7], 128, 128, 8
        $region16: #{tpu_custom_call.1} parent=11 // pred_fallthru
          _
        // Predicated region
        $region17: #{tpu_custom_call.1} parent=11 // pred_check
          %p242 = pneg %p88
        $region18: #{tpu_custom_call.1} parent=11 // pred_check_branch
          %244 = sbr.rel (%p242) target = $region20
        $region19: #{tpu_custom_call.1} parent=11 // pred_region
          _
        $region20: #{tpu_custom_call.1} parent=11 // pred_fallthru
          _
        // Predicated region
        $region21: #{tpu_custom_call.1} parent=11 // pred_check
          %p245 = pneg %p109
        $region22: #{tpu_custom_call.1} parent=11 // pred_check_branch
          %247 = sbr.rel (%p245) target = $region24
        $region23: #{tpu_custom_call.1} parent=11 // pred_region
          _
        $region24: #{tpu_custom_call.1} parent=11 // pred_fallthru
          _
        // Predicated region
        $region25: #{tpu_custom_call.1} parent=11 // pred_check
          %p248 = pneg %p130
        $region26: #{tpu_custom_call.1} parent=11 // pred_check_branch
          %250 = sbr.rel (%p248) target = $region28
        $region27: #{tpu_custom_call.1} parent=11 // pred_region
          %s252 = ssub.s32 512, 512
          %253 = vsyncadd [#allocation7], %s252
          %s254 = sshll.u32 [#allocation8], 4
          %s255 = int_to_ptr.vmem [resolvable:$true] %s254
          %260 = dma.hbm_to_vmem [thread:$0]  %s4, 512, %s255, [#allocation7], 128, 128, 8
        $region28: #{tpu_custom_call.1} parent=11 // pred_fallthru
          _
        // Predicated region
        $region29: #{tpu_custom_call.1} parent=11 // pred_check
          %p261 = pneg %p151
        $region30: #{tpu_custom_call.1} parent=11 // pred_check_branch
          %263 = sbr.rel (%p261) target = $region32
        $region31: #{tpu_custom_call.1} parent=11 // pred_region
          _
        $region32: #{tpu_custom_call.1} parent=11 // pred_fallthru
          _
        // Predicated region
        $region33: #{tpu_custom_call.1} parent=11 // pred_check
          %p264 = pneg %p172
        $region34: #{tpu_custom_call.1} parent=11 // pred_check_branch
          %266 = sbr.rel (%p264) target = $region36
        $region35: #{tpu_custom_call.1} parent=11 // pred_region
          %s268 = ssub.s32 512, 512
          %269 = vsyncadd [#allocation10], %s268
          %s270 = sshll.u32 [#allocation9], 4
          %s271 = int_to_ptr.vmem [resolvable:$true] %s270
          %276 = dma.hbm_to_vmem [thread:$0]  %s6, 512, %s271, [#allocation10], 128, 128, 8
        $region36: #{tpu_custom_call.1} parent=11 // pred_fallthru
          _
        // Predicated region
        $region37: #{tpu_custom_call.1} parent=11 // pred_check
          %p277 = pneg %p193
        $region38: #{tpu_custom_call.1} parent=11 // pred_check_branch
          %279 = sbr.rel (%p277) target = $region40
        $region39: #{tpu_custom_call.1} parent=11 // pred_region
          _
        $region40: #{tpu_custom_call.1} parent=11 // pred_fallthru
          _
      $region12: #{tpu_custom_call.1} parent=5 // pred_fallthru
        _
      %p280 = scmp.lt.s32.totalorder %s20, 2
      // Predicated region
      $region41: #{tpu_custom_call.1} parent=5 // pred_check
        %p281 = pneg %p280
      $region42: #{tpu_custom_call.1} parent=5 // pred_check_branch
        %283 = sbr.rel (%p281) target = $region44
      $region43: #{tpu_custom_call.1} parent=5 // pred_region
        // Predicated region
        $region45: #{tpu_custom_call.1} parent=43 // pred_check
          %p284 = pneg %p40
        $region46: #{tpu_custom_call.1} parent=43 // pred_check_branch
          %286 = sbr.rel (%p284) target = $region48
        $region47: #{tpu_custom_call.1} parent=43 // pred_region
          %s287 = sand.u32 %s30, 1
          %s288 = scalar_lea.sflag [#allocation4], %s287
          %s289 = sand.u32 %s30, 1
          %s290 = smul.addr %s289, 8
          %s291 = scalar_lea.vmem [#allocation3], %s290
          %s293 = ssub.s32 128, 128
          %294 = vsyncadd %s288, %s293
          %s295 = smul.addr %s20, 64
          %s296 = scalar_lea.hbm %s0, %s295
          %s297 = sshll.u32 %s291, 4
          %s298 = int_to_ptr.vmem [resolvable:$true] %s297
          %303 = dma.hbm_to_vmem [thread:$0]  %s296, 128, %s298, %s288, 128, 64, 4
        $region48: #{tpu_custom_call.1} parent=43 // pred_fallthru
          _
      $region44: #{tpu_custom_call.1} parent=5 // pred_fallthru
        _
      %p304 = scmp.le.s32.totalorder 1, %s20
      %p305 = scmp.lt.s32.totalorder %s20, 3
      %p306 = pnand %p304, %p305
      %p307 = pneg %p306
      // Predicated region
      $region49: #{tpu_custom_call.1} parent=5 // pred_check
        _
      $region50: #{tpu_custom_call.1} parent=5 // pred_check_branch
        %309 = sbr.rel (%p306) target = $region52
      $region51: #{tpu_custom_call.1} parent=5 // pred_region
        %s310 = ssub.s32 %s20, 1
        %s311 = sand.u32 %s33, 1
        %s312 = scalar_lea.sflag [#allocation4], %s311
        %s313 = sand.u32 %s33, 1
        %s314 = smul.addr %s313, 8
        %s315 = scalar_lea.vmem [#allocation3], %s314
        // Predicated region
        $region53: #{tpu_custom_call.1} parent=51 // pred_check
          %p316 = pneg %p46
        $region54: #{tpu_custom_call.1} parent=51 // pred_check_branch
          %318 = sbr.rel (%p316) target = $region56
        $region55: #{tpu_custom_call.1} parent=51 // pred_region
          %319 = dma.done %s312, 128
        $region56: #{tpu_custom_call.1} parent=51 // pred_fallthru
          _
        // Predicated region
        $region57: #{tpu_custom_call.1} parent=51 // pred_check
          %p320 = pneg %p67
        $region58: #{tpu_custom_call.1} parent=51 // pred_check_branch
          %322 = sbr.rel (%p320) target = $region60
        $region59: #{tpu_custom_call.1} parent=51 // pred_region
          %323 = dma.done [#allocation7], 256
        $region60: #{tpu_custom_call.1} parent=51 // pred_fallthru
          _
        // Predicated region
        $region61: #{tpu_custom_call.1} parent=51 // pred_check
          %p324 = pneg %p130
        $region62: #{tpu_custom_call.1} parent=51 // pred_check_branch
          %326 = sbr.rel (%p324) target = $region64
        $region63: #{tpu_custom_call.1} parent=51 // pred_region
          %327 = dma.done [#allocation7], 512
        $region64: #{tpu_custom_call.1} parent=51 // pred_fallthru
          _
        // Predicated region
        $region65: #{tpu_custom_call.1} parent=51 // pred_check
          %p328 = pneg %p172
        $region66: #{tpu_custom_call.1} parent=51 // pred_check_branch
          %330 = sbr.rel (%p328) target = $region68
        $region67: #{tpu_custom_call.1} parent=51 // pred_region
          %331 = dma.done [#allocation10], 512
        $region68: #{tpu_custom_call.1} parent=51 // pred_fallthru
          _
        %s332 = sand.u32 %s33, 1
        %s333 = scalar_lea.sflag [#allocation4], %s332
        %s334 = sand.u32 %s33, 1
        %s335 = smul.addr %s334, 8
        %s336 = scalar_lea.vmem [#allocation3], %s335
        %p337 = pneg %p46
        %p338 = pneg %p43
        %p339 = pneg %p67
        %p340 = pneg %p64
        %p341 = pneg %p88
        %p342 = pneg %p85
        %p343 = pneg %p109
        %p344 = pneg %p106
        %p345 = pneg %p130
        %p346 = pneg %p127
        %p347 = pneg %p151
        %p348 = pneg %p148
        %p349 = pneg %p172
        %p350 = pneg %p169
        %p351 = pneg %p193
        %p352 = pneg %p190
        %p353 = pneg %p214
        %p354 = pneg %p211
        %p355 = scmp.eq.s32.totalorder %s25, 0
        // Predicated region
        $region69: #{tpu_custom_call.1} parent=51 // pred_check
          %p356 = pneg %p355
        $region70: #{tpu_custom_call.1} parent=51 // pred_check_branch
          %358 = sbr.rel (%p356) target = $region72
        $region71: #{tpu_custom_call.1} parent=51 // pred_region
          %vm359 = vcmask 25600
          %360 = vst.msk [vmem:[#allocation2] sm:$0x3] %vm359, 0.0
        $region72: #{tpu_custom_call.1} parent=51 // pred_fallthru
          _
        %v361 = vld [vmem:[#allocation2] sm:$0x3]
        %v362 = vld [vmem:[%s315] sm:$0xf]
        %v363 = vld [vmem:[%s315 + $0x4] sm:$0xf]
        %vm364 = vcmask 1043456
        %v365 = vsel %vm364, %v362, 0.0
        %366 = vadd.xlane.f32.xlu0 %v365
        %v367 = vpop.xlane.xlu0 %366
        %v368 = vsel %vm364, %v363, 0.0
        %369 = vadd.xlane.f32.xlu0 %v368
        %v370 = vpop.xlane.xlu0 %369
        %v373 = vlaneseq
        %v374 = vand.u32 %v373, 127
        %v375 = vlaneseq
        %v376 = vshrl.u32 %v375, 7
        %v377 = vsub.s32 %v374, %v376
        %v378 = vrot.slane %v367, %v377
        %v379 = vlaneseq
        %v380 = vshrl.u32 %v379, 7
        %v381 = vsub.s32 %v374, %v380
        %v382 = vrot.slane %v370, %v381
        %vm383 = vcmask 1041409
        %v384 = vsel %vm383, %v382, %v378
        %v386 = vadd.f32 %v361, %v384
        %vm387 = vcmask 25600
        %388 = vst.msk [vmem:[#allocation2] sm:$0x3] %vm387, %v386
        %p389 = scmp.eq.s32.totalorder %s25, 1
        // Predicated region
        $region73: #{tpu_custom_call.1} parent=51 // pred_check
          %p390 = pneg %p389
        $region74: #{tpu_custom_call.1} parent=51 // pred_check_branch
          %392 = sbr.rel (%p390) target = $region76
        $region75: #{tpu_custom_call.1} parent=51 // pred_region
          %v393 = vld [vmem:[#allocation2] sm:$0x3]
          %v394 = vmul.f32 %v393, 0.00390625
          %v395 = vld [vmem:[%s2] sm:$0xf]
          %v396 = vld [vmem:[%s3] sm:$0x1]
          %v398 = vlaneseq
          %v399 = vshrl.u32 %v398, 7
          %v400 = vsub.s32 0, %v399
          %v401 = vrot.slane %v396, %v400
          %vm403 = vcmask 31744
          %v405 = vsel %vm403, %v394, 0
          %v408 = vsel %vm364, %v395, 0
          %410 = vmatprep.subr.mxu0 0.0
          %411 = vmatpush1.msra.mxu0 %v408
          %412 = vmatprep.subr.mxu0 0.0
          %413 = vmatpush1.msra.mxu0 0.0
          %414 = vmatprep.subr.mxu0 0.0
          %415 = vmatpush1.msra.mxu0 0.0
          %416 = vmatprep.subr.mxu0 0.0
          %417 = vmatpush1.msra.mxu0 0.0
          %418 = vmatprep.subr.mxu0 0.0
          %419 = vmatpush1.msra.mxu0 0.0
          %420 = vmatprep.subr.mxu0 0.0
          %421 = vmatpush1.msra.mxu0 0.0
          %422 = vmatprep.subr.mxu0 0.0
          %423 = vmatpush1.msra.mxu0 0.0
          %424 = vmatprep.subr.mxu0 0.0
          %425 = vmatpush1.msra.mxu0 0.0
          %426 = vmatprep.subr.mxu0 0.0
          %427 = vmatpush1.msra.mxu0 0.0
          %428 = vmatprep.subr.mxu0 0.0
          %429 = vmatpush1.msra.mxu0 0.0
          %430 = vmatprep.subr.mxu0 0.0
          %431 = vmatpush1.msra.mxu0 0.0
          %432 = vmatprep.subr.mxu0 0.0
          %433 = vmatpush1.msra.mxu0 0.0
          %434 = vmatprep.subr.mxu0 0.0
          %435 = vmatpush1.msra.mxu0 0.0
          %436 = vmatprep.subr.mxu0 0.0
          %437 = vmatpush1.msra.mxu0 0.0
          %438 = vmatprep.subr.mxu0 0.0
          %439 = vmatpush1.msra.mxu0 0.0
          %440 = vmatprep.subr.mxu0 0.0
          %441 = vmatpush1.msra.mxu0 0.0
          %442 = vmatprep.subr.mxu0 0.0
          %443 = vmatpush1.msra.mxu0 0.0
          %444 = vmatprep.subr.mxu0 0.0
          %445 = vmatpush1.msra.mxu0 0.0
          %446 = vmatprep.subr.mxu0 0.0
          %447 = vmatpush1.msra.mxu0 0.0
          %448 = vmatprep.subr.mxu0 0.0
          %449 = vmatpush1.msra.mxu0 0.0
          %450 = vmatprep.subr.mxu0 0.0
          %451 = vmatpush1.msra.mxu0 0.0
          %452 = vmatprep.subr.mxu0 0.0
          %453 = vmatpush1.msra.mxu0 0.0
          %454 = vmatprep.subr.mxu0 0.0
          %455 = vmatpush1.msra.mxu0 0.0
          %456 = vmatprep.subr.mxu0 0.0
          %457 = vmatpush1.msra.mxu0 0.0
          %458 = vmatprep.subr.mxu0 0.0
          %459 = vmatpush1.msra.mxu0 0.0
          %460 = vmatprep.subr.mxu0 0.0
          %461 = vmatpush1.msra.mxu0 0.0
          %462 = vmatprep.subr.mxu0 0.0
          %463 = vmatpush1.msra.mxu0 0.0
          %464 = vmatprep.subr.mxu0 0.0
          %465 = vmatpush1.msra.mxu0 0.0
          %466 = vmatprep.subr.mxu0 0.0
          %467 = vmatpush1.msra.mxu0 0.0
          %468 = vmatprep.subr.mxu0 0.0
          %469 = vmatpush1.msra.mxu0 0.0
          %470 = vmatprep.subr.mxu0 0.0
          %471 = vmatpush1.msra.mxu0 0.0
          %472 = vmatprep.subr.mxu0 0.0
          %473 = vmatpush1.msra.mxu0 0.0
          %474 = vmatprep.mubr.f32.mxu0 0.0
          %475 = vmatmul.mubr.f32.gmra.mrb[0].mxu0 %v405
          %v476 = vpop.f32.mrb[0].mxu0
          %v477 = vadd.f32 %v401, %v476
          %v478 = vpop.f32.mrb[0].mxu0
          %479 = vdwg.mxu0
          %v480 = vld [vmem:[#allocation6] sm:$0xff]
          %v481 = vld [vmem:[#allocation6 + $0x8] sm:$0xff]
          %v482 = vld [vmem:[#allocation8] sm:$0xff]
          %v483 = vld [vmem:[#allocation8 + $0x8] sm:$0xff]
          %v484 = vld [vmem:[#allocation8 + $0x10] sm:$0xff]
          %v485 = vld [vmem:[#allocation8 + $0x18] sm:$0xff]
          %v486 = vld [vmem:[%s5] sm:$0x1]
          %v488 = vlaneseq
          %v489 = vshrl.u32 %v488, 7
          %v490 = vsub.s32 0, %v489
          %v491 = vrot.slane %v486, %v490
          %vm493 = vcmask 261120
          %v495 = vsel %vm493, %v480, 0
          %v498 = vsel %vm493, %v481, 0
          %500 = vmatprep.subr.mxu0 0.0
          %501 = vmatpush1.msra.mxu0 %v482
          %502 = vmatprep.subr.mxu0 0.0
          %503 = vmatpush1.msra.mxu0 %v483
          %504 = vmatprep.subr.mxu0 0.0
          %505 = vmatpush1.msra.mxu0 %v484
          %506 = vmatprep.subr.mxu0 0.0
          %507 = vmatpush1.msra.mxu0 %v485
          %508 = vmatprep.subr.mxu0 0.0
          %509 = vmatpush1.msra.mxu0 0.0
          %510 = vmatprep.subr.mxu0 0.0
          %511 = vmatpush1.msra.mxu0 0.0
          %512 = vmatprep.subr.mxu0 0.0
          %513 = vmatpush1.msra.mxu0 0.0
          %514 = vmatprep.subr.mxu0 0.0
          %515 = vmatpush1.msra.mxu0 0.0
          %516 = vmatprep.subr.mxu0 0.0
          %517 = vmatpush1.msra.mxu0 0.0
          %518 = vmatprep.subr.mxu0 0.0
          %519 = vmatpush1.msra.mxu0 0.0
          %520 = vmatprep.subr.mxu0 0.0
          %521 = vmatpush1.msra.mxu0 0.0
          %522 = vmatprep.subr.mxu0 0.0
          %523 = vmatpush1.msra.mxu0 0.0
          %524 = vmatprep.subr.mxu0 0.0
          %525 = vmatpush1.msra.mxu0 0.0
          %526 = vmatprep.subr.mxu0 0.0
          %527 = vmatpush1.msra.mxu0 0.0
          %528 = vmatprep.subr.mxu0 0.0
          %529 = vmatpush1.msra.mxu0 0.0
          %530 = vmatprep.subr.mxu0 0.0
          %531 = vmatpush1.msra.mxu0 0.0
          %532 = vmatprep.subr.mxu0 0.0
          %533 = vmatpush1.msra.mxu0 0.0
          %534 = vmatprep.subr.mxu0 0.0
          %535 = vmatpush1.msra.mxu0 0.0
          %536 = vmatprep.subr.mxu0 0.0
          %537 = vmatpush1.msra.mxu0 0.0
          %538 = vmatprep.subr.mxu0 0.0
          %539 = vmatpush1.msra.mxu0 0.0
          %540 = vmatprep.subr.mxu0 0.0
          %541 = vmatpush1.msra.mxu0 0.0
          %542 = vmatprep.subr.mxu0 0.0
          %543 = vmatpush1.msra.mxu0 0.0
          %544 = vmatprep.subr.mxu0 0.0
          %545 = vmatpush1.msra.mxu0 0.0
          %546 = vmatprep.subr.mxu0 0.0
          %547 = vmatpush1.msra.mxu0 0.0
          %548 = vmatprep.subr.mxu0 0.0
          %549 = vmatpush1.msra.mxu0 0.0
          %550 = vmatprep.subr.mxu0 0.0
          %551 = vmatpush1.msra.mxu0 0.0
          %552 = vmatprep.subr.mxu0 0.0
          %553 = vmatpush1.msra.mxu0 0.0
          %554 = vmatprep.subr.mxu0 0.0
          %555 = vmatpush1.msra.mxu0 0.0
          %556 = vmatprep.subr.mxu0 0.0
          %557 = vmatpush1.msra.mxu0 0.0
          %558 = vmatprep.subr.mxu0 0.0
          %559 = vmatpush1.msra.mxu0 0.0
          %560 = vmatprep.subr.mxu0 0.0
          %561 = vmatpush1.msra.mxu0 0.0
          %562 = vmatprep.subr.mxu0 0.0
          %563 = vmatpush1.msra.mxu0 0.0
          %564 = vmatprep.mubr.f32.mxu0 0.0
          %565 = vmatmul.mubr.f32.gmra.mrb[0].mxu0 %v495
          %v566 = vpop.f32.mrb[0].mxu0
          %v567 = vadd.f32 %v491, %v566
          %v568 = vpop.f32.mrb[0].mxu0
          %569 = vmatprep.mubr.f32.mxu0 0.0
          %570 = vmatmul.mubr.f32.gmra.mrb[0].mxu0 %v498
          %v571 = vpop.f32.mrb[0].mxu0
          %v572 = vadd.f32 %v491, %v571
          %v573 = vpop.f32.mrb[0].mxu0
          %574 = vdwg.mxu0
          %v575 = vtanh.pop %v567
          %v576 = vtanh.pop %v572
          %v578 = vsel %vm493, %v477, 0
          %v581 = vsel %vm493, %v575, 0
          %v584 = vsel %vm493, %v576, 0
          %586 = vmatprep.subr.mxu0 0.0
          %587 = vmatpush1.xpose.msra.mxu0 %v581
          %588 = vmatprep.subr.mxu0 0.0
          %589 = vmatpush1.xpose.msra.mxu0 %v584
          %590 = vmatprep.subr.mxu0 0.0
          %591 = vmatpush1.xpose.msra.mxu0 0.0
          %592 = vmatprep.subr.mxu0 0.0
          %593 = vmatpush1.xpose.msra.mxu0 0.0
          %594 = vmatprep.subr.mxu0 0.0
          %595 = vmatpush1.xpose.msra.mxu0 0.0
          %596 = vmatprep.subr.mxu0 0.0
          %597 = vmatpush1.xpose.msra.mxu0 0.0
          %598 = vmatprep.subr.mxu0 0.0
          %599 = vmatpush1.xpose.msra.mxu0 0.0
          %600 = vmatprep.subr.mxu0 0.0
          %601 = vmatpush1.xpose.msra.mxu0 0.0
          %602 = vmatprep.subr.mxu0 0.0
          %603 = vmatpush1.xpose.msra.mxu0 0.0
          %604 = vmatprep.subr.mxu0 0.0
          %605 = vmatpush1.xpose.msra.mxu0 0.0
          %606 = vmatprep.subr.mxu0 0.0
          %607 = vmatpush1.xpose.msra.mxu0 0.0
          %608 = vmatprep.subr.mxu0 0.0
          %609 = vmatpush1.xpose.msra.mxu0 0.0
          %610 = vmatprep.subr.mxu0 0.0
          %611 = vmatpush1.xpose.msra.mxu0 0.0
          %612 = vmatprep.subr.mxu0 0.0
          %613 = vmatpush1.xpose.msra.mxu0 0.0
          %614 = vmatprep.subr.mxu0 0.0
          %615 = vmatpush1.xpose.msra.mxu0 0.0
          %616 = vmatprep.subr.mxu0 0.0
          %617 = vmatpush1.xpose.msra.mxu0 0.0
          %618 = vmatprep.subr.mxu0 0.0
          %619 = vmatpush1.xpose.msra.mxu0 0.0
          %620 = vmatprep.subr.mxu0 0.0
          %621 = vmatpush1.xpose.msra.mxu0 0.0
          %622 = vmatprep.subr.mxu0 0.0
          %623 = vmatpush1.xpose.msra.mxu0 0.0
          %624 = vmatprep.subr.mxu0 0.0
          %625 = vmatpush1.xpose.msra.mxu0 0.0
          %626 = vmatprep.subr.mxu0 0.0
          %627 = vmatpush1.xpose.msra.mxu0 0.0
          %628 = vmatprep.subr.mxu0 0.0
          %629 = vmatpush1.xpose.msra.mxu0 0.0
          %630 = vmatprep.subr.mxu0 0.0
          %631 = vmatpush1.xpose.msra.mxu0 0.0
          %632 = vmatprep.subr.mxu0 0.0
          %633 = vmatpush1.xpose.msra.mxu0 0.0
          %634 = vmatprep.subr.mxu0 0.0
          %635 = vmatpush1.xpose.msra.mxu0 0.0
          %636 = vmatprep.subr.mxu0 0.0
          %637 = vmatpush1.xpose.msra.mxu0 0.0
          %638 = vmatprep.subr.mxu0 0.0
          %639 = vmatpush1.xpose.msra.mxu0 0.0
          %640 = vmatprep.subr.mxu0 0.0
          %641 = vmatpush1.xpose.msra.mxu0 0.0
          %642 = vmatprep.subr.mxu0 0.0
          %643 = vmatpush1.xpose.msra.mxu0 0.0
          %644 = vmatprep.subr.mxu0 0.0
          %645 = vmatpush1.xpose.msra.mxu0 0.0
          %646 = vmatprep.subr.mxu0 0.0
          %647 = vmatpush1.xpose.msra.mxu0 0.0
          %648 = vmatprep.subr.mxu0 0.0
          %649 = vmatpush1.xpose.msra.mxu0 0.0
          %650 = vmatprep.mubr.f32.mxu0 0.0
          %651 = vmatmul.mubr.f32.gmra.mrb[0].mxu0 %v578
          %v652 = vpop.f32.mrb[0].mxu0
          %v653 = vadd.f32 0.0, %v652
          %v654 = vpop.f32.mrb[0].mxu0
          %655 = vdwg.mxu0
          %v656 = vmul.f32 %v653, 0.17677669
          %v657 = vlaneseq
          %v658 = vshrl.u32 %v657, 7
          %v659 = vmul.u32 %v658, 8
          %vm660 = vcmp.ge.s32.totalorder %v374, %v659
          %v661 = vadd.s32 %v659, 8
          %vm662 = vcmp.lt.s32.totalorder %v374, %v661
          %vm663 = vmand %vm660, %vm662
          %v664 = vsel %vm663, %v656, -1e+30
          %vm665 = vcmask 123904
          %v666 = vsel %vm665, %v664, -inf
          %667 = vmax.xlane.f32.xlu0 %v666
          %v668 = vpop.xlane.xlu0 %667
          %v669 = vsub.f32 %v664, %v668
          %v670 = vmul.f32 %v669, 1.442695
          %v671 = vpow.pop %v670
          %v672 = vsel %vm665, %v671, 0.0
          %673 = vadd.xlane.f32.xlu0 %v672
          %v674 = vpop.xlane.xlu0 %673
          %v675 = vrcp.pop %v674
          %v676 = vmul.f32 %v671, %v675
          %vm677 = vcmask 130048
          %v679 = vsel %vm677, %v676, 0
          %681 = vmatprep.subr.mxu0 0.0
          %682 = vmatpush1.msra.mxu0 %v480
          %683 = vmatprep.subr.mxu0 0.0
          %684 = vmatpush1.msra.mxu0 %v481
          %685 = vmatprep.subr.mxu0 0.0
          %686 = vmatpush1.msra.mxu0 0.0
          %687 = vmatprep.subr.mxu0 0.0
          %688 = vmatpush1.msra.mxu0 0.0
          %689 = vmatprep.subr.mxu0 0.0
          %690 = vmatpush1.msra.mxu0 0.0
          %691 = vmatprep.subr.mxu0 0.0
          %692 = vmatpush1.msra.mxu0 0.0
          %693 = vmatprep.subr.mxu0 0.0
          %694 = vmatpush1.msra.mxu0 0.0
          %695 = vmatprep.subr.mxu0 0.0
          %696 = vmatpush1.msra.mxu0 0.0
          %697 = vmatprep.subr.mxu0 0.0
          %698 = vmatpush1.msra.mxu0 0.0
          %699 = vmatprep.subr.mxu0 0.0
          %700 = vmatpush1.msra.mxu0 0.0
          %701 = vmatprep.subr.mxu0 0.0
          %702 = vmatpush1.msra.mxu0 0.0
          %703 = vmatprep.subr.mxu0 0.0
          %704 = vmatpush1.msra.mxu0 0.0
          %705 = vmatprep.subr.mxu0 0.0
          %706 = vmatpush1.msra.mxu0 0.0
          %707 = vmatprep.subr.mxu0 0.0
          %708 = vmatpush1.msra.mxu0 0.0
          %709 = vmatprep.subr.mxu0 0.0
          %710 = vmatpush1.msra.mxu0 0.0
          %711 = vmatprep.subr.mxu0 0.0
          %712 = vmatpush1.msra.mxu0 0.0
          %713 = vmatprep.subr.mxu0 0.0
          %714 = vmatpush1.msra.mxu0 0.0
          %715 = vmatprep.subr.mxu0 0.0
          %716 = vmatpush1.msra.mxu0 0.0
          %717 = vmatprep.subr.mxu0 0.0
          %718 = vmatpush1.msra.mxu0 0.0
          %719 = vmatprep.subr.mxu0 0.0
          %720 = vmatpush1.msra.mxu0 0.0
          %721 = vmatprep.subr.mxu0 0.0
          %722 = vmatpush1.msra.mxu0 0.0
          %723 = vmatprep.subr.mxu0 0.0
          %724 = vmatpush1.msra.mxu0 0.0
          %725 = vmatprep.subr.mxu0 0.0
          %726 = vmatpush1.msra.mxu0 0.0
          %727 = vmatprep.subr.mxu0 0.0
          %728 = vmatpush1.msra.mxu0 0.0
          %729 = vmatprep.subr.mxu0 0.0
          %730 = vmatpush1.msra.mxu0 0.0
          %731 = vmatprep.subr.mxu0 0.0
          %732 = vmatpush1.msra.mxu0 0.0
          %733 = vmatprep.subr.mxu0 0.0
          %734 = vmatpush1.msra.mxu0 0.0
          %735 = vmatprep.subr.mxu0 0.0
          %736 = vmatpush1.msra.mxu0 0.0
          %737 = vmatprep.subr.mxu0 0.0
          %738 = vmatpush1.msra.mxu0 0.0
          %739 = vmatprep.subr.mxu0 0.0
          %740 = vmatpush1.msra.mxu0 0.0
          %741 = vmatprep.subr.mxu0 0.0
          %742 = vmatpush1.msra.mxu0 0.0
          %743 = vmatprep.subr.mxu0 0.0
          %744 = vmatpush1.msra.mxu0 0.0
          %745 = vmatprep.mubr.f32.mxu0 0.0
          %746 = vmatmul.mubr.f32.gmra.mrb[0].mxu0 %v679
          %v747 = vpop.f32.mrb[0].mxu0
          %v748 = vadd.f32 0.0, %v747
          %v749 = vpop.f32.mrb[0].mxu0
          %750 = vdwg.mxu0
          %v751 = vld [vmem:[#allocation9] sm:$0xff]
          %v752 = vld [vmem:[#allocation9 + $0x8] sm:$0xff]
          %v753 = vld [vmem:[#allocation9 + $0x10] sm:$0xff]
          %v754 = vld [vmem:[#allocation9 + $0x18] sm:$0xff]
          %v755 = vld [vmem:[%s7] sm:$0x1]
          %v757 = vlaneseq
          %v758 = vshrl.u32 %v757, 7
          %v759 = vsub.s32 0, %v758
          %v760 = vrot.slane %v755, %v759
          %v763 = vsel %vm493, %v748, 0
          %765 = vmatprep.subr.mxu0 0.0
          %766 = vmatpush1.msra.mxu0 %v751
          %767 = vmatprep.subr.mxu0 0.0
          %768 = vmatpush1.msra.mxu0 %v752
          %769 = vmatprep.subr.mxu0 0.0
          %770 = vmatpush1.msra.mxu0 %v753
          %771 = vmatprep.subr.mxu0 0.0
          %772 = vmatpush1.msra.mxu0 %v754
          %773 = vmatprep.subr.mxu0 0.0
          %774 = vmatpush1.msra.mxu0 0.0
          %775 = vmatprep.subr.mxu0 0.0
          %776 = vmatpush1.msra.mxu0 0.0
          %777 = vmatprep.subr.mxu0 0.0
          %778 = vmatpush1.msra.mxu0 0.0
          %779 = vmatprep.subr.mxu0 0.0
          %780 = vmatpush1.msra.mxu0 0.0
          %781 = vmatprep.subr.mxu0 0.0
          %782 = vmatpush1.msra.mxu0 0.0
          %783 = vmatprep.subr.mxu0 0.0
          %784 = vmatpush1.msra.mxu0 0.0
          %785 = vmatprep.subr.mxu0 0.0
          %786 = vmatpush1.msra.mxu0 0.0
          %787 = vmatprep.subr.mxu0 0.0
          %788 = vmatpush1.msra.mxu0 0.0
          %789 = vmatprep.subr.mxu0 0.0
          %790 = vmatpush1.msra.mxu0 0.0
          %791 = vmatprep.subr.mxu0 0.0
          %792 = vmatpush1.msra.mxu0 0.0
          %793 = vmatprep.subr.mxu0 0.0
          %794 = vmatpush1.msra.mxu0 0.0
          %795 = vmatprep.subr.mxu0 0.0
          %796 = vmatpush1.msra.mxu0 0.0
          %797 = vmatprep.subr.mxu0 0.0
          %798 = vmatpush1.msra.mxu0 0.0
          %799 = vmatprep.subr.mxu0 0.0
          %800 = vmatpush1.msra.mxu0 0.0
          %801 = vmatprep.subr.mxu0 0.0
          %802 = vmatpush1.msra.mxu0 0.0
          %803 = vmatprep.subr.mxu0 0.0
          %804 = vmatpush1.msra.mxu0 0.0
          %805 = vmatprep.subr.mxu0 0.0
          %806 = vmatpush1.msra.mxu0 0.0
          %807 = vmatprep.subr.mxu0 0.0
          %808 = vmatpush1.msra.mxu0 0.0
          %809 = vmatprep.subr.mxu0 0.0
          %810 = vmatpush1.msra.mxu0 0.0
          %811 = vmatprep.subr.mxu0 0.0
          %812 = vmatpush1.msra.mxu0 0.0
          %813 = vmatprep.subr.mxu0 0.0
          %814 = vmatpush1.msra.mxu0 0.0
          %815 = vmatprep.subr.mxu0 0.0
          %816 = vmatpush1.msra.mxu0 0.0
          %817 = vmatprep.subr.mxu0 0.0
          %818 = vmatpush1.msra.mxu0 0.0
          %819 = vmatprep.subr.mxu0 0.0
          %820 = vmatpush1.msra.mxu0 0.0
          %821 = vmatprep.subr.mxu0 0.0
          %822 = vmatpush1.msra.mxu0 0.0
          %823 = vmatprep.subr.mxu0 0.0
          %824 = vmatpush1.msra.mxu0 0.0
          %825 = vmatprep.subr.mxu0 0.0
          %826 = vmatpush1.msra.mxu0 0.0
          %827 = vmatprep.subr.mxu0 0.0
          %828 = vmatpush1.msra.mxu0 0.0
          %829 = vmatprep.mubr.f32.mxu0 0.0
          %830 = vmatmul.mubr.f32.gmra.mrb[0].mxu0 %v763
          %v831 = vpop.f32.mrb[0].mxu0
          %v832 = vadd.f32 %v760, %v831
          %v833 = vpop.f32.mrb[0].mxu0
          %834 = vdwg.mxu0
          %835 = vst [vmem:[#allocation11] sm:$0x3] %v832
        $region76: #{tpu_custom_call.1} parent=51 // pred_fallthru
          _
        // Predicated region
        $region77: #{tpu_custom_call.1} parent=51 // pred_check
          %p836 = pneg %p211
        $region78: #{tpu_custom_call.1} parent=51 // pred_check_branch
          %838 = sbr.rel (%p836) target = $region80
        $region79: #{tpu_custom_call.1} parent=51 // pred_region
          %s840 = ssub.s32 32, 32
          %841 = vsyncadd [#allocation5], %s840
          %s843 = sshll.u32 [#allocation11], 4
          %s844 = int_to_ptr.vmem [resolvable:$true] %s843
          %846 = dma.vmem_to_hbm [thread:$0]  %s844, 32, %s8, [#allocation5]
        $region80: #{tpu_custom_call.1} parent=51 // pred_fallthru
          _
        // Predicated region
        $region81: #{tpu_custom_call.1} parent=51 // pred_check
          %p847 = pneg %p211
        $region82: #{tpu_custom_call.1} parent=51 // pred_check_branch
          %849 = sbr.rel (%p847) target = $region84
        $region83: #{tpu_custom_call.1} parent=51 // pred_region
          %850 = dma.done [#allocation5], 32
        $region84: #{tpu_custom_call.1} parent=51 // pred_fallthru
          _
      $region52: #{tpu_custom_call.1} parent=5 // pred_fallthru
        _
      %p851 = scmp.le.s32.totalorder 2, %s20
      // Predicated region
      $region85: #{tpu_custom_call.1} parent=5 // pred_check
        %p852 = pneg %p851
      $region86: #{tpu_custom_call.1} parent=5 // pred_check_branch
        %854 = sbr.rel (%p852) target = $region88
      $region87: #{tpu_custom_call.1} parent=5 // pred_region
        %s855 = ssub.s32 %s20, 2
      $region88: #{tpu_custom_call.1} parent=5 // pred_fallthru
        _
    $region6: #{tpu_custom_call.1} parent=1 // loop_footer
      %s24 = sadd.s32 1, %s20
    $region7: #{tpu_custom_call.1} parent=1 // loop_footer_branch
      %19 = sbr.rel target = $region3
    $region8: #{tpu_custom_call.1} parent=1 // loop_exit
      _
    %856 = vsyncpa [#allocation4], 1
    %s857 = scalar_lea.sflag [#allocation4], 1
    %858 = vsyncpa %s857, 1
    %859 = vsyncpa [#allocation7], 1
    %860 = vsyncpa [#allocation10], 1
    %861 = vsyncpa [#allocation5], 1
    %s862 = scalar_lea.sflag [#allocation5], 1
    %863 = vsyncpa %s862, 1

</llo_original>
